<compile_context>
chip_gen: v7x
topology: tpu7x:2x2x1
jax: 0.10.0
libtpu: 0.0.40
codegen_flags: <defaults>
</compile_context>

<pallas_src>
import jax
import jax.numpy as jnp
from jax.experimental import pallas as pl
from jax.experimental.pallas import tpu as pltpu

EPS = 1e-5


def _sublane_multiple(dtype) -> int:
    """Minimum second-to-last tile multiple for the given dtype."""
    itemsize = jnp.dtype(dtype).itemsize
    if itemsize >= 4:
        return 8
    if itemsize == 2:
        return 16
    return 32


def _ln_kernel_bias(x_ref, w_ref, b_ref, o_ref):
    # x_ref: (TR, D) tile of rows; w_ref/b_ref: (1, D)
    x = x_ref[...].astype(jnp.float32)
    mean = jnp.mean(x, axis=-1, keepdims=True)
    xc = x - mean
    var = jnp.mean(xc * xc, axis=-1, keepdims=True)   # biased var (PyTorch semantics)
    inv = jax.lax.rsqrt(var + EPS)
    scale = inv * w_ref[...].astype(jnp.float32)       # fold inv-std with weight
    y = xc * scale + b_ref[...].astype(jnp.float32)
    o_ref[...] = y.astype(o_ref.dtype)


def _ln_kernel_nobias(x_ref, w_ref, o_ref):
    x = x_ref[...].astype(jnp.float32)
    mean = jnp.mean(x, axis=-1, keepdims=True)
    xc = x - mean
    var = jnp.mean(xc * xc, axis=-1, keepdims=True)
    inv = jax.lax.rsqrt(var + EPS)
    y = xc * (inv * w_ref[...].astype(jnp.float32))
    o_ref[...] = y.astype(o_ref.dtype)


def layer_norm_pallas(x, weight, bias=None, *, vmem_budget_bytes=24 << 20):
    """LayerNorm over the last dim of x. weight/bias have shape (D,)."""
    orig_shape = x.shape
    D = orig_shape[-1]
    R = 1
    for s in orig_shape[:-1]:
        R *= s
    x2 = x.reshape(R, D)

    sub = _sublane_multiple(x.dtype)
    itemsize = jnp.dtype(x.dtype).itemsize

    # Per grid step we hold (double-buffered) input + output tiles in VMEM:
    # ~ 4 * tr * D * itemsize bytes.  Size tr to the budget, cap at 1024 rows,
    # round to the sublane multiple, and never exceed the (padded) row count.
    bytes_per_row = 4 * D * itemsize
    tr = min(1024, max(sub, vmem_budget_bytes // bytes_per_row))
    tr = max(sub, (tr // sub) * sub)
    r_pad_min = ((R + sub - 1) // sub) * sub
    tr = max(sub, min(tr, r_pad_min))

    # Pad R up to a multiple of the tile (padded rows compute harmlessly:
    # var=0 -> rsqrt(eps), results discarded).
    R_pad = ((R + tr - 1) // tr) * tr
    if R_pad != R:
        x2 = jnp.pad(x2, ((0, R_pad - R), (0, 0)))

    grid = (R_pad // tr,)

    w2 = weight.reshape(1, D)
    in_arrays = [x2, w2]
    in_specs = [
        pl.BlockSpec((tr, D), lambda i: (i, 0)),   # row tile
        pl.BlockSpec((1, D), lambda i: (0, 0)),    # weight (broadcast)
    ]
    if bias is not None:
        in_arrays.append(bias.reshape(1, D))
        in_specs.append(pl.BlockSpec((1, D), lambda i: (0, 0)))  # bias (broadcast)
        kernel = _ln_kernel_bias
    else:
        kernel = _ln_kernel_nobias

    out = pl.pallas_call(
        kernel,
        out_shape=jax.ShapeDtypeStruct((R_pad, D), x.dtype),
        grid_spec=pltpu.PrefetchScalarGridSpec(
            num_scalar_prefetch=0,
            grid=grid,
            in_specs=in_specs,
            out_specs=pl.BlockSpec((tr, D), lambda i: (i, 0)),
        ),
        compiler_params=pltpu.CompilerParams(
            dimension_semantics=("parallel",),     # megacore-shardable on v7x
            vmem_limit_bytes=64 << 20,             # covers v5e's 16 MiB default
        ),
    )(*in_arrays)

    if R_pad != R:
        out = out[:R]
    return out.reshape(orig_shape)


def layer_norm_ref(x, weight, bias=None):
    xf = x.astype(jnp.float32)
    mean = jnp.mean(xf, axis=-1, keepdims=True)
    var = jnp.mean((xf - mean) ** 2, axis=-1, keepdims=True)
    y = (xf - mean) * jax.lax.rsqrt(var + EPS)
    y = y * weight.astype(jnp.float32)
    if bias is not None:
        y = y + bias.astype(jnp.float32)
    return y.astype(x.dtype)


if __name__ == "__main__":
    key = jax.random.PRNGKey(0)
    B, T, D = 2, 8, 32  # batch=2, seq=8, hidden=32

    x = jax.random.normal(key, (B, T, D), dtype=jnp.float32)

    # Deterministic param init, matching nn.Parameter(torch.ones/zeros(ndim))
    weight = jnp.ones((D,), dtype=jnp.float32)
    bias = jnp.zeros((D,), dtype=jnp.float32)

    # bias=True case
    y = layer_norm_pallas(x, weight, bias)
    y = jax.block_until_ready(y)
    y_ref = layer_norm_ref(x, weight, bias)
    assert y.shape == x.shape
    assert jnp.allclose(y, y_ref, atol=1e-5, rtol=1e-5), "mismatch vs reference (bias)"

    # bias=False case (no zeros array, no extra DMA / add)
    y_nb = layer_norm_pallas(x, weight, None)
    y_nb = jax.block_until_ready(y_nb)
    y_nb_ref = layer_norm_ref(x, weight, None)
    assert jnp.allclose(y_nb, y_nb_ref, atol=1e-5, rtol=1e-5), "mismatch vs reference (no bias)"

    print("KERNEL_OK")
</pallas_src>

<mosaic_0001>
module attributes {stable_mosaic.version = 11 : i64} {
  func.func @_ln_kernel_bias(%arg0: i32, %arg1: memref<16x32xf32, #tpu.memory_space<vmem>>, %arg2: memref<1x32xf32, #tpu.memory_space<vmem>>, %arg3: memref<1x32xf32, #tpu.memory_space<vmem>>, %arg4: memref<16x32xf32, #tpu.memory_space<vmem>>) attributes {dimension_semantics = [#tpu.dimension_semantics<parallel>], iteration_bounds = array<i64: 1>, scalar_prefetch = 0 : i64, scratch_operands = 0 : i64, tpu.core_type = #tpu.core_type<tc>, window_params = [{transform_indices = @transform_0, window_bounds = array<i64: 16, 32>}, {pipeline_mode = #tpu.pipeline_mode<synchronous>, transform_indices = @transform_1, window_bounds = array<i64: 1, 32>}, {pipeline_mode = #tpu.pipeline_mode<synchronous>, transform_indices = @transform_2, window_bounds = array<i64: 1, 32>}, {transform_indices = @transform_3, window_bounds = array<i64: 16, 32>}]} {
    %c0 = arith.constant 0 : index
    %c0_0 = arith.constant 0 : index
    %0 = vector.load %arg1[%c0, %c0_0] : memref<16x32xf32, #tpu.memory_space<vmem>>, vector<16x32xf32>
    %cst = arith.constant dense<0.000000e+00> : vector<16xf32>
    %1 = vector.multi_reduction <add>, %0, %cst [1] : vector<16x32xf32> to vector<16xf32>
    %2 = vector.shape_cast %1 : vector<16xf32> to vector<16x1xf32>
    %cst_1 = arith.constant 3.200000e+01 : f32
    %3 = vector.broadcast %cst_1 : f32 to vector<16x1xf32>
    %4 = arith.divf %2, %3 : vector<16x1xf32>
    %5 = vector.broadcast %4 : vector<16x1xf32> to vector<16x32xf32>
    %6 = arith.subf %0, %5 : vector<16x32xf32>
    %7 = arith.mulf %6, %6 : vector<16x32xf32>
    %cst_2 = arith.constant dense<0.000000e+00> : vector<16xf32>
    %8 = vector.multi_reduction <add>, %7, %cst_2 [1] : vector<16x32xf32> to vector<16xf32>
    %9 = vector.shape_cast %8 : vector<16xf32> to vector<16x1xf32>
    %cst_3 = arith.constant 3.200000e+01 : f32
    %10 = vector.broadcast %cst_3 : f32 to vector<16x1xf32>
    %11 = arith.divf %9, %10 : vector<16x1xf32>
    %cst_4 = arith.constant 9.99999974E-6 : f32
    %12 = vector.broadcast %cst_4 : f32 to vector<16x1xf32>
    %13 = arith.addf %11, %12 : vector<16x1xf32>
    %14 = math.rsqrt %13 : vector<16x1xf32>
    %c0_5 = arith.constant 0 : index
    %c0_6 = arith.constant 0 : index
    %15 = vector.load %arg2[%c0_5, %c0_6] : memref<1x32xf32, #tpu.memory_space<vmem>>, vector<1x32xf32>
    %16 = vector.broadcast %14 : vector<16x1xf32> to vector<16x32xf32>
    %17 = vector.broadcast %15 : vector<1x32xf32> to vector<16x32xf32>
    %18 = arith.mulf %16, %17 : vector<16x32xf32>
    %19 = arith.mulf %6, %18 : vector<16x32xf32>
    %c0_7 = arith.constant 0 : index
    %c0_8 = arith.constant 0 : index
    %20 = vector.load %arg3[%c0_7, %c0_8] : memref<1x32xf32, #tpu.memory_space<vmem>>, vector<1x32xf32>
    %21 = vector.broadcast %20 : vector<1x32xf32> to vector<16x32xf32>
    %22 = arith.addf %19, %21 : vector<16x32xf32>
    %c0_9 = arith.constant 0 : index
    %c0_10 = arith.constant 0 : index
    %23 = vector.load %arg4[%c0_9, %c0_10] : memref<16x32xf32, #tpu.memory_space<vmem>>, vector<16x32xf32>
    tpu.vector_store %arg4[%c0_9, %c0_10], %22 {strides = array<i32>} : memref<16x32xf32, #tpu.memory_space<vmem>>, vector<16x32xf32>,
    return
  }
  func.func @transform_0(%arg0: i32) -> (i32, i32) {
    %c0_i32 = arith.constant 0 : i32
    %c0_i32_0 = arith.constant 0 : i32
    return %arg0, %c0_i32 : i32, i32
  }
  func.func @transform_1(%arg0: i32) -> (i32, i32) {
    %c0_i32 = arith.constant 0 : i32
    %c0_i32_0 = arith.constant 0 : i32
    %c0_i32_1 = arith.constant 0 : i32
    return %c0_i32, %c0_i32_0 : i32, i32
  }
  func.func @transform_2(%arg0: i32) -> (i32, i32) {
    %c0_i32 = arith.constant 0 : i32
    %c0_i32_0 = arith.constant 0 : i32
    %c0_i32_1 = arith.constant 0 : i32
    return %c0_i32, %c0_i32_0 : i32, i32
  }
  func.func @transform_3(%arg0: i32) -> (i32, i32) {
    %c0_i32 = arith.constant 0 : i32
    %c0_i32_0 = arith.constant 0 : i32
    return %arg0, %c0_i32 : i32, i32
  }
}

</mosaic_0001>

<llo_original>
// kernel: tpu_custom_call.1
$region0: #{tpu_custom_call.1}
  #allocation0 [shape = 'u32[]', space=smem, size = 0x4, offset = 0x4, fixed_abs, tag = 'smem constant byte address 0x4 - core index']
  #allocation1 [shape = 'u32[144,128]{1,0:T(1,128)}', space=vmem, size = 0x12000, scoped, tag = 'internal scratch']
  %s0 = inlined_call_operand.hbm [shape: f32[16,32], index: 0, kind: input, shape index: {}]
  %s1 = inlined_call_operand.hbm [shape: f32[1,32], index: 1, kind: input, shape index: {}]
  %s2 = inlined_call_operand.hbm [shape: f32[1,32], index: 2, kind: input, shape index: {}]
  %s3 = inlined_call_operand.hbm [shape: f32[16,32], index: 3, kind: output, shape index: {}]
  %s4 = sld [smem:[#allocation0]]
  $region34: #{tpu_custom_call.1} parent=0
    _
  %s6 = ssub.s32 1, %s4
  %s7 = scalar_select 0, %s6, %s4
  $region1: #{tpu_custom_call.1} parent=0
    #allocation2 [shape = 'u8[8192]{0}', space=vmem, size = 0x2000, scoped, tag = 'input window, operand 0, single buffered']
    #allocation3 [shape = 's32[1]{0}', space=sflag, size = 0x4, scoped, tag = 'scoped memory for tpu_custom_call.1']
    #allocation4 [shape = 's32[1]{0}', space=sflag, size = 0x4, scoped, tag = 'scoped memory for tpu_custom_call.1']
    #allocation5 [shape = 'u8[512]{0}', space=vmem, size = 0x400, scoped, tag = 'input window, operand 1, single buffered']
    #allocation6 [shape = 's32[1]{0}', space=sflag, size = 0x4, scoped, tag = 'scoped memory for tpu_custom_call.1']
    #allocation7 [shape = 'u8[512]{0}', space=vmem, size = 0x400, scoped, tag = 'input window, operand 2, single buffered']
    #allocation8 [shape = 'u8[8192]{0}', space=vmem, size = 0x2000, scoped, tag = 'output window, operand 0, single buffered']
    %8 = vsyncpa [#allocation3], 0
    %9 = vsyncpa [#allocation6], 0
    %10 = vsyncpa [#allocation4], 0
    // Predicated region
    $region2: #{tpu_custom_call.1} parent=1 // pred_check
      _
    $region3: #{tpu_custom_call.1} parent=1 // pred_check_branch
      %12 = sbr.rel (0) target = $region5
    $region4: #{tpu_custom_call.1} parent=1 // pred_region
      %s14 = ssub.s32 256, 256
      %15 = vsyncadd [#allocation3], %s14
      %s16 = sshll.u32 [#allocation2], 4
      %s17 = int_to_ptr.vmem [resolvable:$true] %s16
      %22 = dma.hbm_to_vmem [thread:$0]  %s0, 256, %s17, [#allocation3], 128, 128, 8
    $region5: #{tpu_custom_call.1} parent=1 // pred_fallthru
      _
    // Predicated region
    $region6: #{tpu_custom_call.1} parent=1 // pred_check
      _
    $region7: #{tpu_custom_call.1} parent=1 // pred_check_branch
      %24 = sbr.rel (0) target = $region9
    $region8: #{tpu_custom_call.1} parent=1 // pred_region
      %s26 = ssub.s32 16, 16
      %27 = vsyncadd [#allocation6], %s26
      %s29 = sshll.u32 [#allocation5], 4
      %s30 = int_to_ptr.vmem [resolvable:$true] %s29
      %32 = dma.hbm_to_vmem [thread:$0]  %s1, 16, %s30, [#allocation6]
    $region9: #{tpu_custom_call.1} parent=1 // pred_fallthru
      _
    // Predicated region
    $region10: #{tpu_custom_call.1} parent=1 // pred_check
      _
    $region11: #{tpu_custom_call.1} parent=1 // pred_check_branch
      %34 = sbr.rel (0) target = $region13
    $region12: #{tpu_custom_call.1} parent=1 // pred_region
      %s36 = ssub.s32 16, 16
      %37 = vsyncadd [#allocation6], %s36
      %s39 = sshll.u32 [#allocation7], 4
      %s40 = int_to_ptr.vmem [resolvable:$true] %s39
      %42 = dma.hbm_to_vmem [thread:$0]  %s2, 16, %s40, [#allocation6]
    $region13: #{tpu_custom_call.1} parent=1 // pred_fallthru
      _
    // Predicated region
    $region14: #{tpu_custom_call.1} parent=1 // pred_check
      _
    $region15: #{tpu_custom_call.1} parent=1 // pred_check_branch
      %44 = sbr.rel (0) target = $region17
    $region16: #{tpu_custom_call.1} parent=1 // pred_region
      %45 = dma.done [#allocation3], 256
    $region17: #{tpu_custom_call.1} parent=1 // pred_fallthru
      _
    // Predicated region
    $region18: #{tpu_custom_call.1} parent=1 // pred_check
      _
    $region19: #{tpu_custom_call.1} parent=1 // pred_check_branch
      %47 = sbr.rel (0) target = $region21
    $region20: #{tpu_custom_call.1} parent=1 // pred_region
      %48 = dma.done [#allocation6], 16
    $region21: #{tpu_custom_call.1} parent=1 // pred_fallthru
      _
    // Predicated region
    $region22: #{tpu_custom_call.1} parent=1 // pred_check
      _
    $region23: #{tpu_custom_call.1} parent=1 // pred_check_branch
      %50 = sbr.rel (0) target = $region25
    $region24: #{tpu_custom_call.1} parent=1 // pred_region
      %51 = dma.done [#allocation6], 16
    $region25: #{tpu_custom_call.1} parent=1 // pred_fallthru
      _
    %v52 = vld [vmem:[#allocation2] sm:$0xff]
    %v53 = vld [vmem:[#allocation2 + $0x8] sm:$0xff]
    %vm54 = vcmask 261120
    %v55 = vsel %vm54, %v52, 0.0
    %56 = vadd.xlane.f32.xlu0 %v55
    %v57 = vpop.xlane.xlu0 %56
    %v58 = vsel %vm54, %v53, 0.0
    %59 = vadd.xlane.f32.xlu0 %v58
    %v60 = vpop.xlane.xlu0 %59
    %v61 = vrcp.pop 32.0
    %v62 = vmul.f32 %v57, %v61
    %v63 = vmul.f32 %v60, %v61
    %v64 = vsub.f32 %v52, %v62
    %v65 = vsub.f32 %v53, %v63
    %v66 = vmul.f32 %v64, %v64
    %v67 = vmul.f32 %v65, %v65
    %v68 = vsel %vm54, %v66, 0.0
    %69 = vadd.xlane.f32.xlu0 %v68
    %v70 = vpop.xlane.xlu0 %69
    %v71 = vsel %vm54, %v67, 0.0
    %72 = vadd.xlane.f32.xlu0 %v71
    %v73 = vpop.xlane.xlu0 %72
    %v74 = vmul.f32 %v70, %v61
    %v75 = vmul.f32 %v73, %v61
    %v76 = vadd.f32 %v74, 1e-05
    %v77 = vadd.f32 %v75, 1e-05
    %v78 = vrsqrt.pop %v76
    %v79 = vrsqrt.pop %v77
    %v80 = vld [vmem:[#allocation5] sm:$0x1]
    %v82 = vlaneseq
    %v83 = vshrl.u32 %v82, 7
    %v84 = vsub.s32 0, %v83
    %v85 = vrot.slane %v80, %v84
    %v87 = vmul.f32 %v78, %v85
    %v88 = vmul.f32 %v79, %v85
    %v89 = vmul.f32 %v64, %v87
    %v90 = vmul.f32 %v65, %v88
    %v91 = vld [vmem:[#allocation7] sm:$0x1]
    %v93 = vlaneseq
    %v94 = vshrl.u32 %v93, 7
    %v95 = vsub.s32 0, %v94
    %v96 = vrot.slane %v91, %v95
    %v98 = vadd.f32 %v89, %v96
    %v99 = vadd.f32 %v90, %v96
    %100 = vst.msk [vmem:[#allocation8] sm:$0xff] %vm54, %v98
    %101 = vst.msk [vmem:[#allocation8 + $0x8] sm:$0xff] %vm54, %v99
    // Predicated region
    $region26: #{tpu_custom_call.1} parent=1 // pred_check
      _
    $region27: #{tpu_custom_call.1} parent=1 // pred_check_branch
      %103 = sbr.rel (0) target = $region29
    $region28: #{tpu_custom_call.1} parent=1 // pred_region
      %s105 = ssub.s32 256, 256
      %106 = vsyncadd [#allocation4], %s105
      %s107 = sshll.u32 [#allocation8], 4
      %s108 = int_to_ptr.vmem [resolvable:$true] %s107
      %113 = dma.vmem_to_hbm [thread:$0]  %s108, 256, %s3, [#allocation4], 128, 128, 8
    $region29: #{tpu_custom_call.1} parent=1 // pred_fallthru
      _
    // Predicated region
    $region30: #{tpu_custom_call.1} parent=1 // pred_check
      _
    $region31: #{tpu_custom_call.1} parent=1 // pred_check_branch
      %115 = sbr.rel (0) target = $region33
    $region32: #{tpu_custom_call.1} parent=1 // pred_region
      %116 = dma.done [#allocation4], 256
    $region33: #{tpu_custom_call.1} parent=1 // pred_fallthru
      _
    %117 = vsyncpa [#allocation3], 1
    %118 = vsyncpa [#allocation6], 1
    %119 = vsyncpa [#allocation4], 1

</llo_original>
